<compile_context>
chip_gen: v5e
topology: v5e:2x2
jax: 0.10.0
libtpu: 0.0.40
codegen_flags: <defaults>
</compile_context>

<pallas_src>
import functools

import jax
import jax.numpy as jnp
from jax.experimental import pallas as pl
from jax.experimental.pallas import tpu as pltpu

LANE = 128
BF16_SUBLANE = 16   # minimum sublane tile for bf16 blocks
HID1 = 128
HID2 = 64           # logical hidden-2 width
HID2_PAD = 128      # lane-dense padded hidden-2 width


def _round_up(x, m):
    return (x + m - 1) // m * m


def _dqn_kernel(x_ref, w1_ref, b1_ref, w2_ref, b2_ref, w3_ref, b3_ref, out_ref):
    """One batch tile: 3 MXU matmuls (bf16 operands, f32 accumulate) + f32 bias/ReLU."""
    # x streamed as f32; cast to bf16 in-kernel (VPU cast hides under DMA/MXU).
    x = x_ref[...].astype(w1_ref.dtype)                                  # (TB, S) bf16
    h1 = jnp.dot(x, w1_ref[...], preferred_element_type=jnp.float32) + b1_ref[...]
    h1 = jnp.maximum(h1, 0.0)                                            # (TB, 128) f32

    # Intentional bf16 cast of activations for MXU-native matmuls; accumulation stays f32.
    h2 = jnp.dot(h1.astype(w2_ref.dtype), w2_ref[...],
                 preferred_element_type=jnp.float32) + b2_ref[...]
    h2 = jnp.maximum(h2, 0.0)                                            # (TB, 128) lane-dense

    q = jnp.dot(h2.astype(w3_ref.dtype), w3_ref[...],
                preferred_element_type=jnp.float32) + b3_ref[...]
    out_ref[...] = q.astype(out_ref.dtype)                               # (TB, 128) bf16 store


@functools.partial(jax.jit, static_argnames=("action_dim", "block_batch"))
def dqn_forward(x, w1, b1, w2, b2, w3, b3, *, action_dim, block_batch=1024):
    batch, state_dim = x.shape
    n_pad = w3.shape[1]                      # lane-padded final width (128)

    # Batch tile: validated multiple of 16, capped at 4096 (VMEM-safe on v5e/v6e/v7x).
    tb_max = max(BF16_SUBLANE, min(_round_up(int(block_batch), BF16_SUBLANE), 4096))
    b_pad = _round_up(batch, BF16_SUBLANE)   # output rows rounded to the bf16 sublane tile only
    tb = min(tb_max, b_pad)
    # v7x has 2 TensorCores: guarantee >= 2 grid steps whenever the batch is big enough to split.
    if batch >= 2 * BF16_SUBLANE:
        tb = min(tb, _round_up(pl.cdiv(b_pad, 2), BF16_SUBLANE))
    grid = (pl.cdiv(b_pad, tb),)

    flops = 2 * b_pad * (state_dim * HID1 + HID1 * HID2_PAD + HID2_PAD * n_pad)
    bytes_accessed = (
        x.size * x.dtype.itemsize
        + sum(int(a.size) * a.dtype.itemsize for a in (w1, b1, w2, b2, w3, b3))
        + b_pad * n_pad * 2                  # bf16 output slab
    )

    out = pl.pallas_call(
        _dqn_kernel,
        grid=grid,
        in_specs=[
            pl.BlockSpec((tb, state_dim), lambda i: (i, 0)),   # x: pipelined batch tiles (f32)
            pl.BlockSpec(w1.shape, lambda i: (0, 0)),          # weights/biases: VMEM-resident
            pl.BlockSpec(b1.shape, lambda i: (0, 0)),
            pl.BlockSpec(w2.shape, lambda i: (0, 0)),
            pl.BlockSpec(b2.shape, lambda i: (0, 0)),
            pl.BlockSpec(w3.shape, lambda i: (0, 0)),
            pl.BlockSpec(b3.shape, lambda i: (0, 0)),
        ],
        out_specs=pl.BlockSpec((tb, n_pad), lambda i: (i, 0)),  # lane-dense (TB, 128) bf16 tiles
        out_shape=jax.ShapeDtypeStruct((b_pad, n_pad), jnp.bfloat16),
        compiler_params=pltpu.CompilerParams(
            dimension_semantics=("parallel",),
        ),
        cost_estimate=pl.CostEstimate(
            flops=flops, transcendentals=0, bytes_accessed=bytes_accessed
        ),
    )(x, w1, b1, w2, b2, w3, b3)

    # Slice away sublane batch padding and the zero-padded action columns.
    return out[:batch, :action_dim]


def init_params(key, state_dim, action_dim, weight_dtype=jnp.bfloat16):
    """nn.Linear-style init U(-1/sqrt(fan_in), 1/sqrt(fan_in)).

    Weights are stored pre-transposed as (in_features, out_features). For lane-dense tiles:
      * layer 2's output columns are zero-padded 64 -> 128 (padded h2 cols are relu(0)=0),
      * layer 3's input rows are zero-padded 64 -> 128 (zero rows contribute nothing),
      * layer 3's output columns are zero-padded to a multiple of 128.
    Weights cast to `weight_dtype` (bf16 for MXU peak); biases stay f32.
    """
    n_pad = _round_up(max(action_dim, LANE), LANE)
    # (logical_fan_in, logical_fan_out, stored_in, stored_out)
    dims = [
        (state_dim, HID1, state_dim, HID1),
        (HID1, HID2, HID1, HID2_PAD),
        (HID2, action_dim, HID2_PAD, n_pad),
    ]
    params = []
    for fan_in, fan_out, in_pad, out_pad in dims:
        key, kw, kb = jax.random.split(key, 3)
        bound = 1.0 / (float(fan_in) ** 0.5)
        w = jax.random.uniform(kw, (fan_in, fan_out), jnp.float32, -bound, bound)
        b = jax.random.uniform(kb, (1, fan_out), jnp.float32, -bound, bound)
        if in_pad != fan_in or out_pad != fan_out:
            w = jnp.pad(w, ((0, in_pad - fan_in), (0, out_pad - fan_out)))
            b = jnp.pad(b, ((0, 0), (0, out_pad - fan_out)))
        params += [w.astype(weight_dtype), b.astype(jnp.float32)]
    return params


def reference_forward(x, w1, b1, w2, b2, w3, b3, action_dim):
    """Pure-f32 reference on the (zero-padded) params; slices padded action columns."""
    f32 = jnp.float32
    h1 = jnp.maximum(x.astype(f32) @ w1.astype(f32) + b1, 0.0)
    h2 = jnp.maximum(h1 @ w2.astype(f32) + b2, 0.0)
    q = h2 @ w3.astype(f32) + b3
    return q[:, :action_dim]


if __name__ == "__main__":
    state_dim = 16
    action_dim = 4
    batch = 2

    key = jax.random.PRNGKey(0)
    key, kx = jax.random.split(key)
    x = jax.random.normal(kx, (batch, state_dim), jnp.float32)

    w1, b1, w2, b2, w3, b3 = init_params(key, state_dim, action_dim)

    out = dqn_forward(x, w1, b1, w2, b2, w3, b3, action_dim=action_dim)
    out = jax.block_until_ready(out)

    ref = reference_forward(x, w1, b1, w2, b2, w3, b3, action_dim)
    assert out.shape == (batch, action_dim), f"bad shape {out.shape}"
    # bf16 weights/activations/output with f32 accumulation vs pure-f32 reference.
    assert jnp.allclose(out.astype(jnp.float32), ref, atol=3e-2, rtol=3e-2), \
        "Pallas output mismatch vs reference"

    print("KERNEL_OK")
</pallas_src>

<mosaic_0001>
module attributes {stable_mosaic.version = 11 : i64} {
  func.func @_dqn_kernel(%arg0: i32, %arg1: memref<16x16xf32, #tpu.memory_space<vmem>>, %arg2: memref<16x128xbf16, #tpu.memory_space<vmem>>, %arg3: memref<1x128xf32, #tpu.memory_space<vmem>>, %arg4: memref<128x128xbf16, #tpu.memory_space<vmem>>, %arg5: memref<1x128xf32, #tpu.memory_space<vmem>>, %arg6: memref<128x128xbf16, #tpu.memory_space<vmem>>, %arg7: memref<1x128xf32, #tpu.memory_space<vmem>>, %arg8: memref<16x128xbf16, #tpu.memory_space<vmem>>) attributes {dimension_semantics = [#tpu.dimension_semantics<parallel>], iteration_bounds = array<i64: 1>, scalar_prefetch = 0 : i64, scratch_operands = 0 : i64, tpu.core_type = #tpu.core_type<tc>, window_params = [{transform_indices = @transform_0, window_bounds = array<i64: 16, 16>}, {pipeline_mode = #tpu.pipeline_mode<synchronous>, transform_indices = @transform_1, window_bounds = array<i64: 16, 128>}, {pipeline_mode = #tpu.pipeline_mode<synchronous>, transform_indices = @transform_2, window_bounds = array<i64: 1, 128>}, {pipeline_mode = #tpu.pipeline_mode<synchronous>, transform_indices = @transform_3, window_bounds = array<i64: 128, 128>}, {pipeline_mode = #tpu.pipeline_mode<synchronous>, transform_indices = @transform_4, window_bounds = array<i64: 1, 128>}, {pipeline_mode = #tpu.pipeline_mode<synchronous>, transform_indices = @transform_5, window_bounds = array<i64: 128, 128>}, {pipeline_mode = #tpu.pipeline_mode<synchronous>, transform_indices = @transform_6, window_bounds = array<i64: 1, 128>}, {transform_indices = @transform_7, window_bounds = array<i64: 16, 128>}]} {
    %c0 = arith.constant 0 : index
    %c0_0 = arith.constant 0 : index
    %0 = vector.load %arg1[%c0, %c0_0] : memref<16x16xf32, #tpu.memory_space<vmem>>, vector<16x16xf32>
    %1 = arith.truncf %0 : vector<16x16xf32> to vector<16x16xbf16>
    %c0_1 = arith.constant 0 : index
    %c0_2 = arith.constant 0 : index
    %2 = vector.load %arg2[%c0_1, %c0_2] : memref<16x128xbf16, #tpu.memory_space<vmem>>, vector<16x128xbf16>
    %cst = arith.constant dense<0.000000e+00> : vector<16x128xf32>
    %3 = tpu.matmul %1, %2, %cst {dimension_numbers = #tpu.dot_dimension_numbers<[1], [0], [0], [1], [0, 0, 1, 1], [], []>} : vector<16x16xbf16>, vector<16x128xbf16>, vector<16x128xf32> -> vector<16x128xf32>
    %c0_3 = arith.constant 0 : index
    %c0_4 = arith.constant 0 : index
    %4 = vector.load %arg3[%c0_3, %c0_4] : memref<1x128xf32, #tpu.memory_space<vmem>>, vector<1x128xf32>
    %5 = vector.broadcast %4 : vector<1x128xf32> to vector<16x128xf32>
    %6 = arith.addf %3, %5 : vector<16x128xf32>
    %cst_5 = arith.constant 0.000000e+00 : f32
    %7 = vector.broadcast %cst_5 : f32 to vector<16x128xf32>
    %8 = arith.maximumf %6, %7 : vector<16x128xf32>
    %9 = arith.truncf %8 : vector<16x128xf32> to vector<16x128xbf16>
    %c0_6 = arith.constant 0 : index
    %c0_7 = arith.constant 0 : index
    %10 = vector.load %arg4[%c0_6, %c0_7] : memref<128x128xbf16, #tpu.memory_space<vmem>>, vector<128x128xbf16>
    %cst_8 = arith.constant dense<0.000000e+00> : vector<16x128xf32>
    %11 = tpu.matmul %9, %10, %cst_8 {dimension_numbers = #tpu.dot_dimension_numbers<[1], [0], [0], [1], [0, 0, 1, 1], [], []>} : vector<16x128xbf16>, vector<128x128xbf16>, vector<16x128xf32> -> vector<16x128xf32>
    %c0_9 = arith.constant 0 : index
    %c0_10 = arith.constant 0 : index
    %12 = vector.load %arg5[%c0_9, %c0_10] : memref<1x128xf32, #tpu.memory_space<vmem>>, vector<1x128xf32>
    %13 = vector.broadcast %12 : vector<1x128xf32> to vector<16x128xf32>
    %14 = arith.addf %11, %13 : vector<16x128xf32>
    %cst_11 = arith.constant 0.000000e+00 : f32
    %15 = vector.broadcast %cst_11 : f32 to vector<16x128xf32>
    %16 = arith.maximumf %14, %15 : vector<16x128xf32>
    %17 = arith.truncf %16 : vector<16x128xf32> to vector<16x128xbf16>
    %c0_12 = arith.constant 0 : index
    %c0_13 = arith.constant 0 : index
    %18 = vector.load %arg6[%c0_12, %c0_13] : memref<128x128xbf16, #tpu.memory_space<vmem>>, vector<128x128xbf16>
    %cst_14 = arith.constant dense<0.000000e+00> : vector<16x128xf32>
    %19 = tpu.matmul %17, %18, %cst_14 {dimension_numbers = #tpu.dot_dimension_numbers<[1], [0], [0], [1], [0, 0, 1, 1], [], []>} : vector<16x128xbf16>, vector<128x128xbf16>, vector<16x128xf32> -> vector<16x128xf32>
    %c0_15 = arith.constant 0 : index
    %c0_16 = arith.constant 0 : index
    %20 = vector.load %arg7[%c0_15, %c0_16] : memref<1x128xf32, #tpu.memory_space<vmem>>, vector<1x128xf32>
    %21 = vector.broadcast %20 : vector<1x128xf32> to vector<16x128xf32>
    %22 = arith.addf %19, %21 : vector<16x128xf32>
    %23 = arith.truncf %22 : vector<16x128xf32> to vector<16x128xbf16>
    %c0_17 = arith.constant 0 : index
    %c0_18 = arith.constant 0 : index
    %24 = vector.load %arg8[%c0_17, %c0_18] : memref<16x128xbf16, #tpu.memory_space<vmem>>, vector<16x128xbf16>
    tpu.vector_store %arg8[%c0_17, %c0_18], %23 {strides = array<i32>} : memref<16x128xbf16, #tpu.memory_space<vmem>>, vector<16x128xbf16>,
    return
  }
  func.func @transform_0(%arg0: i32) -> (i32, i32) {
    %c0_i32 = arith.constant 0 : i32
    %c0_i32_0 = arith.constant 0 : i32
    return %arg0, %c0_i32 : i32, i32
  }
  func.func @transform_1(%arg0: i32) -> (i32, i32) {
    %c0_i32 = arith.constant 0 : i32
    %c0_i32_0 = arith.constant 0 : i32
    %c0_i32_1 = arith.constant 0 : i32
    return %c0_i32, %c0_i32_0 : i32, i32
  }
  func.func @transform_2(%arg0: i32) -> (i32, i32) {
    %c0_i32 = arith.constant 0 : i32
    %c0_i32_0 = arith.constant 0 : i32
    %c0_i32_1 = arith.constant 0 : i32
    return %c0_i32, %c0_i32_0 : i32, i32
  }
  func.func @transform_3(%arg0: i32) -> (i32, i32) {
    %c0_i32 = arith.constant 0 : i32
    %c0_i32_0 = arith.constant 0 : i32
    %c0_i32_1 = arith.constant 0 : i32
    return %c0_i32, %c0_i32_0 : i32, i32
  }
  func.func @transform_4(%arg0: i32) -> (i32, i32) {
    %c0_i32 = arith.constant 0 : i32
    %c0_i32_0 = arith.constant 0 : i32
    %c0_i32_1 = arith.constant 0 : i32
    return %c0_i32, %c0_i32_0 : i32, i32
  }
  func.func @transform_5(%arg0: i32) -> (i32, i32) {
    %c0_i32 = arith.constant 0 : i32
    %c0_i32_0 = arith.constant 0 : i32
    %c0_i32_1 = arith.constant 0 : i32
    return %c0_i32, %c0_i32_0 : i32, i32
  }
  func.func @transform_6(%arg0: i32) -> (i32, i32) {
    %c0_i32 = arith.constant 0 : i32
    %c0_i32_0 = arith.constant 0 : i32
    %c0_i32_1 = arith.constant 0 : i32
    return %c0_i32, %c0_i32_0 : i32, i32
  }
  func.func @transform_7(%arg0: i32) -> (i32, i32) {
    %c0_i32 = arith.constant 0 : i32
    %c0_i32_0 = arith.constant 0 : i32
    return %arg0, %c0_i32 : i32, i32
  }
}

</mosaic_0001>

<llo_original>
// kernel: dqn_forward.1
$region0: #{dqn_forward.1}
  #allocation0 [shape = 'u32[]', space=smem, size = 0x4, offset = 0x4, fixed_abs, tag = 'smem constant byte address 0x4 - core index']
  #allocation1 [shape = 'u32[72,128]{1,0:T(1,128)}', space=vmem, size = 0x9000, scoped, tag = 'internal scratch']
  %s0 = inlined_call_operand.hbm [shape: f32[2,16], index: 0, kind: input, shape index: {}]
  %s1 = inlined_call_operand.hbm [shape: bf16[16,128], index: 1, kind: input, shape index: {}]
  %s2 = inlined_call_operand.vmem [shape: f32[1,128], index: 2, kind: input, shape index: {}]
  %s3 = inlined_call_operand.hbm [shape: bf16[128,128], index: 3, kind: input, shape index: {}]
  %s4 = inlined_call_operand.vmem [shape: f32[1,128], index: 4, kind: input, shape index: {}]
  %s5 = inlined_call_operand.hbm [shape: bf16[128,128], index: 5, kind: input, shape index: {}]
  %s6 = inlined_call_operand.vmem [shape: f32[1,128], index: 6, kind: input, shape index: {}]
  %s7 = inlined_call_operand.vmem [shape: bf16[16,128], index: 7, kind: output, shape index: {}]
  %s8 = sld [smem:[#allocation0]]
  $region54: #{dqn_forward.1} parent=0
    _
  %s10 = ssub.s32 1, %s8
  %s11 = scalar_select 0, %s10, %s8
  $region1: #{dqn_forward.1} parent=0
    #allocation2 [shape = 'u8[8192]{0}', space=vmem, size = 0x2000, scoped, tag = 'input window, operand 0, single buffered']
    #allocation3 [shape = 's32[1]{0}', space=sflag, size = 0x4, scoped, tag = 'scoped memory for dqn_forward.1']
    #allocation4 [shape = 'u8[4096]{0}', space=vmem, size = 0x1000, scoped, tag = 'input window, operand 1, single buffered']
    #allocation5 [shape = 's32[1]{0}', space=sflag, size = 0x4, scoped, tag = 'scoped memory for dqn_forward.1']
    #allocation6 [shape = 'u8[32768]{0}', space=vmem, size = 0x8000, scoped, tag = 'input window, operand 3, single buffered']
    #allocation7 [shape = 'u8[32768]{0}', space=vmem, size = 0x8000, scoped, tag = 'input window, operand 5, single buffered']
    #allocation8 [shape = 's32[1]{0}', space=sflag, size = 0x4, scoped, tag = 'scoped memory for dqn_forward.1']
    %12 = vsyncpa [#allocation3], 0
    %13 = vsyncpa [#allocation5], 0
    %14 = vsyncpa [#allocation8], 0
    // Predicated region
    $region2: #{dqn_forward.1} parent=1 // pred_check
      _
    $region3: #{dqn_forward.1} parent=1 // pred_check_branch
      %16 = sbr.rel (0) target = $region5
    $region4: #{dqn_forward.1} parent=1 // pred_region
      %18 = vsyncadd [#allocation3], 224
      %s19 = sshll.u32 %s0, 4
      %s20 = int_to_ptr.hbm [resolvable:$true] %s19
      %s21 = sshll.u32 [#allocation2], 4
      %s22 = int_to_ptr.vmem [resolvable:$true] %s21
      %27 = dma.hbm_to_vmem [thread:$0]  %s20, 32, %s22, [#allocation3], 32, 32, 2
    $region5: #{dqn_forward.1} parent=1 // pred_fallthru
      _
    // Predicated region
    $region6: #{dqn_forward.1} parent=1 // pred_check
      _
    $region7: #{dqn_forward.1} parent=1 // pred_check_branch
      %29 = sbr.rel (0) target = $region9
    $region8: #{dqn_forward.1} parent=1 // pred_region
      %31 = vsyncadd [#allocation5], 0
      %s32 = sshll.u32 %s1, 4
      %s33 = int_to_ptr.hbm [resolvable:$true] %s32
      %s34 = sshll.u32 [#allocation4], 4
      %s35 = int_to_ptr.vmem [resolvable:$true] %s34
      %40 = dma.hbm_to_vmem [thread:$0]  %s33, 128, %s35, [#allocation5], 64, 64, 4
    $region9: #{dqn_forward.1} parent=1 // pred_fallthru
      _
    // Predicated region
    $region10: #{dqn_forward.1} parent=1 // pred_check
      _
    $region11: #{dqn_forward.1} parent=1 // pred_check_branch
      %42 = sbr.rel (0) target = $region13
    $region12: #{dqn_forward.1} parent=1 // pred_region
      _
    $region13: #{dqn_forward.1} parent=1 // pred_fallthru
      _
    // Predicated region
    $region14: #{dqn_forward.1} parent=1 // pred_check
      _
    $region15: #{dqn_forward.1} parent=1 // pred_check_branch
      %44 = sbr.rel (0) target = $region17
    $region16: #{dqn_forward.1} parent=1 // pred_region
      %46 = vsyncadd [#allocation5], 0
      %s47 = sshll.u32 %s3, 4
      %s48 = int_to_ptr.hbm [resolvable:$true] %s47
      %s49 = sshll.u32 [#allocation6], 4
      %s50 = int_to_ptr.vmem [resolvable:$true] %s49
      %55 = dma.hbm_to_vmem [thread:$0]  %s48, 1024, %s50, [#allocation5], 64, 64, 4
    $region17: #{dqn_forward.1} parent=1 // pred_fallthru
      _
    // Predicated region
    $region18: #{dqn_forward.1} parent=1 // pred_check
      _
    $region19: #{dqn_forward.1} parent=1 // pred_check_branch
      %57 = sbr.rel (0) target = $region21
    $region20: #{dqn_forward.1} parent=1 // pred_region
      _
    $region21: #{dqn_forward.1} parent=1 // pred_fallthru
      _
    // Predicated region
    $region22: #{dqn_forward.1} parent=1 // pred_check
      _
    $region23: #{dqn_forward.1} parent=1 // pred_check_branch
      %59 = sbr.rel (0) target = $region25
    $region24: #{dqn_forward.1} parent=1 // pred_region
      %61 = vsyncadd [#allocation8], 0
      %s62 = sshll.u32 %s5, 4
      %s63 = int_to_ptr.hbm [resolvable:$true] %s62
      %s64 = sshll.u32 [#allocation7], 4
      %s65 = int_to_ptr.vmem [resolvable:$true] %s64
      %70 = dma.hbm_to_vmem [thread:$0]  %s63, 1024, %s65, [#allocation8], 64, 64, 4
    $region25: #{dqn_forward.1} parent=1 // pred_fallthru
      _
    // Predicated region
    $region26: #{dqn_forward.1} parent=1 // pred_check
      _
    $region27: #{dqn_forward.1} parent=1 // pred_check_branch
      %72 = sbr.rel (0) target = $region29
    $region28: #{dqn_forward.1} parent=1 // pred_region
      _
    $region29: #{dqn_forward.1} parent=1 // pred_fallthru
      _
    // Predicated region
    $region30: #{dqn_forward.1} parent=1 // pred_check
      _
    $region31: #{dqn_forward.1} parent=1 // pred_check_branch
      %74 = sbr.rel (0) target = $region33
    $region32: #{dqn_forward.1} parent=1 // pred_region
      %76 = dma.done [#allocation3], 256
    $region33: #{dqn_forward.1} parent=1 // pred_fallthru
      _
    // Predicated region
    $region34: #{dqn_forward.1} parent=1 // pred_check
      _
    $region35: #{dqn_forward.1} parent=1 // pred_check_branch
      %78 = sbr.rel (0) target = $region37
    $region36: #{dqn_forward.1} parent=1 // pred_region
      %80 = dma.done [#allocation5], 128
    $region37: #{dqn_forward.1} parent=1 // pred_fallthru
      _
    // Predicated region
    $region38: #{dqn_forward.1} parent=1 // pred_check
      _
    $region39: #{dqn_forward.1} parent=1 // pred_check_branch
      %82 = sbr.rel (0) target = $region41
    $region40: #{dqn_forward.1} parent=1 // pred_region
      %84 = dma.done [#allocation5], 1024
    $region41: #{dqn_forward.1} parent=1 // pred_fallthru
      _
    // Predicated region
    $region42: #{dqn_forward.1} parent=1 // pred_check
      _
    $region43: #{dqn_forward.1} parent=1 // pred_check_branch
      %86 = sbr.rel (0) target = $region45
    $region44: #{dqn_forward.1} parent=1 // pred_region
      %88 = dma.done [#allocation8], 1024
    $region45: #{dqn_forward.1} parent=1 // pred_fallthru
      _
    %v90 = vld [vmem:[#allocation2] sm:$0xff]
    %v91 = vld [vmem:[#allocation2 + $0x8] sm:$0xff]
    %v92 = vpack.c.bf16 %v91, %v90
    %v93 = vld [vmem:[#allocation4] sm:$0xf]
    %v94 = vld [vmem:[#allocation4 + $0x4] sm:$0xf]
    %v95 = vld [vmem:[%s2] sm:$0x1]
    %v97 = vperm.slane %v95, 0
    %v101 = vunpack.c.l.b16 %v93
    %v102 = vunpack.c.l.b16 %v94
    %v103 = vpack.c.b16 %v102, %v101
    %vm105 = vcmask 130048
    %v107 = vsel %vm105, %v92, 0
    %109 = vmatpush.bf16.msra.mxu0 0
    %110 = vmatpush.bf16.msra.mxu0 0
    %111 = vmatpush.bf16.msra.mxu0 0
    %112 = vmatpush.bf16.msra.mxu0 0
    %113 = vmatpush.bf16.msra.mxu0 0
    %114 = vmatpush.bf16.msra.mxu0 0
    %115 = vmatpush.bf16.msra.mxu0 0
    %116 = vmatpush.bf16.msra.mxu0 %v103
    %117 = vmatmul.bf16.gmra.mxu0 %v107
    %v118 = vpop.f32.mrf.mxu0
    %v119 = vadd.f32 %v97, %v118
    %v120 = vpop.f32.mrf.mxu0
    %v121 = vadd.f32 %v97, %v120
    %122 = vdwg.mxu0
    %v123 = vmax.f32 %v119, 0.0
    %v124 = vmax.f32 %v121, 0.0
    %v125 = vpack.c.bf16 %v124, %v123
    %v126 = vld [vmem:[#allocation6] sm:$0xf]
    %v127 = vld [vmem:[#allocation6 + $0x4] sm:$0xf]
    %v128 = vld [vmem:[#allocation6 + $0x8] sm:$0xf]
    %v129 = vld [vmem:[#allocation6 + $0xc] sm:$0xf]
    %v130 = vld [vmem:[#allocation6 + $0x10] sm:$0xf]
    %v131 = vld [vmem:[#allocation6 + $0x14] sm:$0xf]
    %v132 = vld [vmem:[#allocation6 + $0x18] sm:$0xf]
    %v133 = vld [vmem:[#allocation6 + $0x1c] sm:$0xf]
    %v134 = vld [vmem:[#allocation6 + $0x20] sm:$0xf]
    %v135 = vld [vmem:[#allocation6 + $0x24] sm:$0xf]
    %v136 = vld [vmem:[#allocation6 + $0x28] sm:$0xf]
    %v137 = vld [vmem:[#allocation6 + $0x2c] sm:$0xf]
    %v138 = vld [vmem:[#allocation6 + $0x30] sm:$0xf]
    %v139 = vld [vmem:[#allocation6 + $0x34] sm:$0xf]
    %v140 = vld [vmem:[#allocation6 + $0x38] sm:$0xf]
    %v141 = vld [vmem:[#allocation6 + $0x3c] sm:$0xf]
    %v142 = vld [vmem:[%s4] sm:$0x1]
    %v144 = vperm.slane %v142, 0
    %v162 = vunpack.c.l.b16 %v126
    %v163 = vunpack.c.l.b16 %v127
    %v164 = vunpack.c.l.b16 %v128
    %v165 = vunpack.c.l.b16 %v129
    %v166 = vunpack.c.l.b16 %v130
    %v167 = vunpack.c.l.b16 %v131
    %v168 = vunpack.c.l.b16 %v132
    %v169 = vunpack.c.l.b16 %v133
    %v170 = vunpack.c.l.b16 %v134
    %v171 = vunpack.c.l.b16 %v135
    %v172 = vunpack.c.l.b16 %v136
    %v173 = vunpack.c.l.b16 %v137
    %v174 = vunpack.c.l.b16 %v138
    %v175 = vunpack.c.l.b16 %v139
    %v176 = vunpack.c.l.b16 %v140
    %v177 = vunpack.c.l.b16 %v141
    %v178 = vpack.c.b16 %v163, %v162
    %v179 = vpack.c.b16 %v165, %v164
    %v180 = vpack.c.b16 %v167, %v166
    %v181 = vpack.c.b16 %v169, %v168
    %v182 = vpack.c.b16 %v171, %v170
    %v183 = vpack.c.b16 %v173, %v172
    %v184 = vpack.c.b16 %v175, %v174
    %v185 = vpack.c.b16 %v177, %v176
    %194 = vmatpush.bf16.msra.mxu0 %v185
    %195 = vmatpush.bf16.msra.mxu0 %v184
    %196 = vmatpush.bf16.msra.mxu0 %v183
    %197 = vmatpush.bf16.msra.mxu0 %v182
    %198 = vmatpush.bf16.msra.mxu0 %v181
    %199 = vmatpush.bf16.msra.mxu0 %v180
    %200 = vmatpush.bf16.msra.mxu0 %v179
    %201 = vmatpush.bf16.msra.mxu0 %v178
    %202 = vmatmul.bf16.gmra.mxu0 %v125
    %v203 = vpop.f32.mrf.mxu0
    %v204 = vadd.f32 %v144, %v203
    %v205 = vpop.f32.mrf.mxu0
    %v206 = vadd.f32 %v144, %v205
    %207 = vdwg.mxu0
    %v208 = vmax.f32 %v204, 0.0
    %v209 = vmax.f32 %v206, 0.0
    %v210 = vpack.c.bf16 %v209, %v208
    %v211 = vld [vmem:[#allocation7] sm:$0xf]
    %v212 = vld [vmem:[#allocation7 + $0x4] sm:$0xf]
    %v213 = vld [vmem:[#allocation7 + $0x8] sm:$0xf]
    %v214 = vld [vmem:[#allocation7 + $0xc] sm:$0xf]
    %v215 = vld [vmem:[#allocation7 + $0x10] sm:$0xf]
    %v216 = vld [vmem:[#allocation7 + $0x14] sm:$0xf]
    %v217 = vld [vmem:[#allocation7 + $0x18] sm:$0xf]
    %v218 = vld [vmem:[#allocation7 + $0x1c] sm:$0xf]
    %v219 = vld [vmem:[#allocation7 + $0x20] sm:$0xf]
    %v220 = vld [vmem:[#allocation7 + $0x24] sm:$0xf]
    %v221 = vld [vmem:[#allocation7 + $0x28] sm:$0xf]
    %v222 = vld [vmem:[#allocation7 + $0x2c] sm:$0xf]
    %v223 = vld [vmem:[#allocation7 + $0x30] sm:$0xf]
    %v224 = vld [vmem:[#allocation7 + $0x34] sm:$0xf]
    %v225 = vld [vmem:[#allocation7 + $0x38] sm:$0xf]
    %v226 = vld [vmem:[#allocation7 + $0x3c] sm:$0xf]
    %v227 = vld [vmem:[%s6] sm:$0x1]
    %v229 = vperm.slane %v227, 0
    %v247 = vunpack.c.l.b16 %v211
    %v248 = vunpack.c.l.b16 %v212
    %v249 = vunpack.c.l.b16 %v213
    %v250 = vunpack.c.l.b16 %v214
    %v251 = vunpack.c.l.b16 %v215
    %v252 = vunpack.c.l.b16 %v216
    %v253 = vunpack.c.l.b16 %v217
    %v254 = vunpack.c.l.b16 %v218
    %v255 = vunpack.c.l.b16 %v219
    %v256 = vunpack.c.l.b16 %v220
    %v257 = vunpack.c.l.b16 %v221
    %v258 = vunpack.c.l.b16 %v222
    %v259 = vunpack.c.l.b16 %v223
    %v260 = vunpack.c.l.b16 %v224
    %v261 = vunpack.c.l.b16 %v225
    %v262 = vunpack.c.l.b16 %v226
    %v263 = vpack.c.b16 %v248, %v247
    %v264 = vpack.c.b16 %v250, %v249
    %v265 = vpack.c.b16 %v252, %v251
    %v266 = vpack.c.b16 %v254, %v253
    %v267 = vpack.c.b16 %v256, %v255
    %v268 = vpack.c.b16 %v258, %v257
    %v269 = vpack.c.b16 %v260, %v259
    %v270 = vpack.c.b16 %v262, %v261
    %279 = vmatpush.bf16.msra.mxu0 %v270
    %280 = vmatpush.bf16.msra.mxu0 %v269
    %281 = vmatpush.bf16.msra.mxu0 %v268
    %282 = vmatpush.bf16.msra.mxu0 %v267
    %283 = vmatpush.bf16.msra.mxu0 %v266
    %284 = vmatpush.bf16.msra.mxu0 %v265
    %285 = vmatpush.bf16.msra.mxu0 %v264
    %286 = vmatpush.bf16.msra.mxu0 %v263
    %287 = vmatmul.bf16.gmra.mxu0 %v210
    %v288 = vpop.f32.mrf.mxu0
    %v289 = vadd.f32 %v229, %v288
    %v290 = vpop.f32.mrf.mxu0
    %v291 = vadd.f32 %v229, %v290
    %292 = vdwg.mxu0
    %v293 = vpack.c.bf16 %v289, %v289
    %v294 = vpack.c.bf16 %v291, %v291
    %295 = vst [vmem:[%s7] sm:$0xf] %v293
    %296 = vst [vmem:[%s7 + $0x4] sm:$0xf] %v294
    // Predicated region
    $region46: #{dqn_forward.1} parent=1 // pred_check
      _
    $region47: #{dqn_forward.1} parent=1 // pred_check_branch
      %298 = sbr.rel (0) target = $region49
    $region48: #{dqn_forward.1} parent=1 // pred_region
      _
    $region49: #{dqn_forward.1} parent=1 // pred_fallthru
      _
    // Predicated region
    $region50: #{dqn_forward.1} parent=1 // pred_check
      _
    $region51: #{dqn_forward.1} parent=1 // pred_check_branch
      %300 = sbr.rel (0) target = $region53
    $region52: #{dqn_forward.1} parent=1 // pred_region
      _
    $region53: #{dqn_forward.1} parent=1 // pred_fallthru
      _
    %301 = vsyncpa [#allocation3], 1
    %302 = vsyncpa [#allocation5], 1
    %303 = vsyncpa [#allocation8], 1

</llo_original>
